<compile_context>
chip_gen: v5e
topology: v5e:2x2
jax: 0.10.0
libtpu: 0.0.40
codegen_flags: <defaults>
</compile_context>

<pallas_src>
import functools

import jax
import jax.numpy as jnp
from jax.experimental import pallas as pl
from jax.experimental.pallas import tpu as pltpu

# ---- synthetic "config" constants (DiffusionAutoAug.config) ----
GEN_ALPHA = 1.0       # config.generator_alpha
GEN_BETA = 0.1        # config.generator_beta
STUDENT_MAX = 2.0     # config.student_max
NUM_CLASSES = 10


def _round_up(x, m):
    return ((x + m - 1) // m) * m


def _gen_loss_kernel(x_ref, wf_ref, bf_ref,            # inputs
                     y_ref, loss_ref,                  # outputs
                     acc_t, acc_s,                     # VMEM scratch accumulators
                     *, num_classes, batch, tile_b, n_inner, mask_needed):
    """One batch tile per grid step; loss sums accumulate across the inner axis."""
    o = pl.program_id(0)
    i = pl.program_id(1)
    nc = num_classes

    @pl.when(i == 0)
    def _():
        acc_t[...] = jnp.zeros_like(acc_t)
        acc_s[...] = jnp.zeros_like(acc_s)

    # ---- fused teacher|student logits: [TB, 2*NC] f32 (bf16 MXU, f32 accum) ----
    x_bf = x_ref[...].astype(jnp.bfloat16)               # in-kernel cast, no extra HBM pass
    logits = jnp.dot(x_bf, wf_ref[...],
                     preferred_element_type=jnp.float32) + bf_ref[...]
    tb, c2 = logits.shape

    col = jax.lax.broadcasted_iota(jnp.int32, (tb, c2), 1)
    is_t = col < nc                                       # teacher columns [0, NC)

    logits_t = jnp.where(is_t, logits, -jnp.inf)          # student cols masked out
    logits_s = jnp.where(is_t, -jnp.inf, logits)          # teacher cols masked out

    # ---- pseudo labels: first-occurrence argmax over teacher columns ----
    max_t = jnp.max(logits_t, axis=1, keepdims=True)                  # [TB, 1]
    y_col = jnp.min(jnp.where(logits_t == max_t, col, c2),
                    axis=1, keepdims=True)                            # [TB, 1] int32

    # ---- teacher CE per row: logsumexp - picked, and picked == max_t ----
    t_row = jnp.log(jnp.sum(jnp.exp(logits_t - max_t),
                            axis=1, keepdims=True))                   # [TB, 1]

    # ---- student CE per row ----
    max_s = jnp.max(logits_s, axis=1, keepdims=True)
    lse_s = jnp.log(jnp.sum(jnp.exp(logits_s - max_s),
                            axis=1, keepdims=True)) + max_s
    picked_s = jnp.sum(jnp.where(col == (y_col + nc), logits, 0.0),
                       axis=1, keepdims=True)
    s_row = lse_s - picked_s                                          # [TB, 1]

    # ---- mask batch-padding rows (only traced when padding exists) ----
    if mask_needed:
        tile_idx = o * n_inner + i
        row = jax.lax.broadcasted_iota(jnp.int32, (tb, 1), 0) + tile_idx * tile_b
        valid = (row < batch).astype(jnp.float32)
        t_row = t_row * valid
        s_row = s_row * valid
    acc_t[...] += jnp.sum(t_row, axis=0, keepdims=True)
    acc_s[...] += jnp.sum(s_row, axis=0, keepdims=True)

    # ---- lane-dense y writeback: one-hot NT matmul moves labels sublane->lane ----
    onehot = (col == y_col).astype(jnp.bfloat16)          # exactly one 1 per row
    cls8 = jax.lax.broadcasted_iota(jnp.int32, (8, c2), 1).astype(jnp.bfloat16)
    y_rows = jax.lax.dot_general(
        cls8, onehot,
        dimension_numbers=(((1,), (1,)), ((), ())),       # contract class dims (NT matmul)
        preferred_element_type=jnp.float32)               # [8, TB], exact small ints
    y_ref[0] = y_rows[0:1, :].astype(jnp.int32)           # (1, TB) dense-row store

    # ---- finalize: emit raw per-outer-index loss sums (combined in wrapper) ----
    @pl.when(i == pl.num_programs(1) - 1)
    def _():
        lane = jax.lax.broadcasted_iota(jnp.int32, loss_ref.shape, 2)   # (1,1,128)
        t_sum = acc_t[...].reshape(1, 1, 1)
        s_sum = acc_s[...].reshape(1, 1, 1)
        loss_ref[...] = jnp.where(lane == 0, t_sum,
                        jnp.where(lane == 1, s_sum, 0.0))


def diffusion_auto_aug_forward(x_nchw, wt, bt, ws, bs,
                               *, alpha=GEN_ALPHA, beta=GEN_BETA,
                               student_max=STUDENT_MAX):
    """Mirrors DiffusionAutoAug.forward's deterministic compute path.

    Returns (x, y, loss_dict) like the PyTorch module.
    """
    B = x_nchw.shape[0]
    feat = x_nchw.reshape(B, -1)                 # contiguous reshape: no HBM copy
    F_ = feat.shape[1]
    NC = wt.shape[-1]
    elem_bytes = jnp.dtype(feat.dtype).itemsize

    # Tile sizing: double-buffered x stream budget ~24 MiB (measured in the
    # actual streamed dtype), leaving room for the lane-padded f32 logits/exp
    # temporaries and resident fused weights inside the 48 MiB vmem limit.
    x_budget = 24 * 1024 * 1024
    max_tile = max(8, (x_budget // (2 * F_ * elem_bytes)) // 8 * 8)
    tile_b = int(min(4096, max_tile, _round_up(B, 8)))

    n_tiles = -(-B // tile_b)
    # Outer "parallel" axis: shards across both TensorCores on v7x; each outer
    # index emits its own raw loss sums (combined below), so correctness does
    # not depend on the axis running serially.
    n_outer = 2 if n_tiles >= 2 else 1
    n_inner = -(-n_tiles // n_outer)
    n_total = n_outer * n_inner
    B_pad = n_total * tile_b

    if B_pad != B:
        # TODO(synk): this padding copy only occurs when B % tile_b != 0;
        # batches divisible by tile_b stream x straight from HBM with no extra pass.
        feat = jnp.pad(feat, ((0, B_pad - B), (0, 0)))
    mask_needed = B_pad != B

    # Fused classifier: columns [0,NC) teacher, [NC,2*NC) student.
    w_fused = jnp.concatenate([wt, ws], axis=1).astype(jnp.bfloat16)       # [F, 2NC]
    b_fused = jnp.concatenate([bt.reshape(1, NC), bs.reshape(1, NC)],
                              axis=1).astype(jnp.float32)                  # [1, 2NC]

    kernel = functools.partial(_gen_loss_kernel,
                               num_classes=NC, batch=B, tile_b=tile_b,
                               n_inner=n_inner, mask_needed=mask_needed)

    cost = pl.CostEstimate(
        flops=2 * B_pad * F_ * 2 * NC + 2 * B_pad * 2 * NC * 8,
        transcendentals=B_pad * 2 * NC,
        bytes_accessed=(B_pad * F_ * elem_bytes + F_ * 2 * NC * 2
                        + B_pad * 4 + n_outer * 512),
    )

    y_tiles, loss_parts = pl.pallas_call(
        kernel,
        out_shape=(
            jax.ShapeDtypeStruct((n_total, 1, tile_b), jnp.int32),   # pseudo labels (lane-dense)
            jax.ShapeDtypeStruct((n_outer, 1, 128), jnp.float32),    # per-core raw loss sums
        ),
        grid_spec=pltpu.PrefetchScalarGridSpec(
            num_scalar_prefetch=0,
            grid=(n_outer, n_inner),
            in_specs=[
                pl.BlockSpec((tile_b, F_), lambda o, i: (o * n_inner + i, 0)),  # x tiles (pipelined)
                pl.BlockSpec((F_, 2 * NC), lambda o, i: (0, 0)),     # fused weights (resident)
                pl.BlockSpec((1, 2 * NC), lambda o, i: (0, 0)),      # fused bias (resident)
            ],
            out_specs=(
                pl.BlockSpec((1, 1, tile_b), lambda o, i: (o * n_inner + i, 0, 0)),
                pl.BlockSpec((1, 1, 128), lambda o, i: (o, 0, 0)),   # written at last inner step
            ),
            scratch_shapes=[pltpu.VMEM((1, 1), jnp.float32),         # teacher loss sum
                            pltpu.VMEM((1, 1), jnp.float32)],        # student loss sum
        ),
        compiler_params=pltpu.CompilerParams(
            dimension_semantics=("parallel", "arbitrary"),
            vmem_limit_bytes=48 * 1024 * 1024,
        ),
        cost_estimate=cost,
    )(feat, w_fused, b_fused)

    y = y_tiles.reshape(-1)[:B]

    # Scalar epilogue: mean, clamp (applied after combining per-core partials),
    # alpha/beta combine — a handful of scalar XLA ops, negligible cost.
    t_loss = jnp.sum(loss_parts[:, 0, 0]) / B
    s_loss = jnp.sum(loss_parts[:, 0, 1]) / B
    # torch: if s_loss > student_max: s_loss = s_loss/s_loss.item()*student_max
    # -> forward value is exactly student_max.
    s_loss = jnp.where(s_loss > student_max, student_max, s_loss)
    tl = alpha * t_loss
    sl = beta * s_loss
    loss_dict = {"teacher_loss": tl, "student_loss": sl, "total_loss": tl - sl}
    # (x.detach(), y.detach(), loss_dict) equivalent
    return x_nchw, y, loss_dict


def _reference(x_nchw, wt, bt, ws, bs, *, alpha=GEN_ALPHA, beta=GEN_BETA,
               student_max=STUDENT_MAX):
    """Pure-JAX reference (uses the same bf16-rounded operands as the kernel)."""
    B = x_nchw.shape[0]
    feat = x_nchw.reshape(B, -1).astype(jnp.bfloat16).astype(jnp.float32)
    wt32 = wt.astype(jnp.bfloat16).astype(jnp.float32)
    ws32 = ws.astype(jnp.bfloat16).astype(jnp.float32)
    logits_t = feat @ wt32 + bt.reshape(1, -1)
    logits_s = feat @ ws32 + bs.reshape(1, -1)
    y = jnp.argmax(logits_t, axis=1)

    def ce(logits, labels):
        lse = jax.scipy.special.logsumexp(logits, axis=1)
        picked = jnp.take_along_axis(logits, labels[:, None], axis=1)[:, 0]
        return jnp.mean(lse - picked)

    t_loss = ce(logits_t, y)
    s_loss = ce(logits_s, y)
    s_loss = jnp.where(s_loss > student_max, student_max, s_loss)
    return y, alpha * t_loss, beta * s_loss, alpha * t_loss - beta * s_loss


if __name__ == "__main__":
    key = jax.random.PRNGKey(0)
    kx, kwt, kbt, kws, kbs = jax.random.split(key, 5)

    B, C, H, W = 2, 3, 16, 16          # small CIFAR-like batch
    F_ = C * H * W                     # 768 features
    NC = NUM_CLASSES

    x = jax.random.normal(kx, (B, C, H, W), dtype=jnp.float32)
    # deterministic synthetic teacher/student linear-classifier params
    wt = jax.random.normal(kwt, (F_, NC), dtype=jnp.float32) * 0.05
    bt = jax.random.normal(kbt, (NC,), dtype=jnp.float32) * 0.05
    ws = jax.random.normal(kws, (F_, NC), dtype=jnp.float32) * 0.05
    bs = jax.random.normal(kbs, (NC,), dtype=jnp.float32) * 0.05

    x_out, y_out, loss_dict = diffusion_auto_aug_forward(x, wt, bt, ws, bs)
    jax.block_until_ready((x_out, y_out, loss_dict))

    # sanity check against pure-JAX reference
    y_ref, tl_ref, sl_ref, tot_ref = _reference(x, wt, bt, ws, bs)
    assert bool(jnp.all(y_out == y_ref)), "pseudo-label mismatch"
    assert bool(jnp.allclose(loss_dict["teacher_loss"], tl_ref, atol=2e-3)), "teacher loss mismatch"
    assert bool(jnp.allclose(loss_dict["student_loss"], sl_ref, atol=2e-3)), "student loss mismatch"
    assert bool(jnp.allclose(loss_dict["total_loss"], tot_ref, atol=2e-3)), "total loss mismatch"

    print("KERNEL_OK")
</pallas_src>

<mosaic_0001>
module attributes {stable_mosaic.version = 11 : i64} {
  func.func @_gen_loss_kernel(%arg0: i32, %arg1: i32, %arg2: memref<8x768xf32, #tpu.memory_space<vmem>>, %arg3: memref<768x20xbf16, #tpu.memory_space<vmem>>, %arg4: memref<1x20xf32, #tpu.memory_space<vmem>>, %arg5: memref<1x1x8xi32, #tpu.memory_space<vmem>>, %arg6: memref<1x1x128xf32, #tpu.memory_space<vmem>>, %arg7: memref<1x1xf32, #tpu.memory_space<vmem>>, %arg8: memref<1x1xf32, #tpu.memory_space<vmem>>) attributes {dimension_semantics = [#tpu.dimension_semantics<parallel>, #tpu.dimension_semantics<arbitrary>], iteration_bounds = array<i64: 1, 1>, scalar_prefetch = 0 : i64, scratch_operands = 2 : i64, tpu.core_type = #tpu.core_type<tc>, window_params = [{transform_indices = @transform_0, window_bounds = array<i64: 8, 768>}, {pipeline_mode = #tpu.pipeline_mode<synchronous>, transform_indices = @transform_1, window_bounds = array<i64: 768, 20>}, {pipeline_mode = #tpu.pipeline_mode<synchronous>, transform_indices = @transform_2, window_bounds = array<i64: 1, 20>}, {transform_indices = @transform_3, window_bounds = array<i64: 1, 1, 8>}, {transform_indices = @transform_4, window_bounds = array<i64: 1, 1, 128>}]} {
    %c0_i32 = arith.constant 0 : i32
    %0 = arith.cmpi eq, %arg1, %c0_i32 : i32
    %1 = arith.extui %0 : i1 to i32
    %c0_i32_0 = arith.constant 0 : i32
    %2 = arith.cmpi ne, %1, %c0_i32_0 : i32
    scf.if %2 {
      %cst_32 = arith.constant 0.000000e+00 : f32
      %87 = vector.broadcast %cst_32 : f32 to vector<1x1xf32>
      %c0_33 = arith.constant 0 : index
      %c0_34 = arith.constant 0 : index
      %88 = vector.load %arg7[%c0_33, %c0_34] : memref<1x1xf32, #tpu.memory_space<vmem>>, vector<1x1xf32>
      tpu.vector_store %arg7[%c0_33, %c0_34], %87 {strides = array<i32>} : memref<1x1xf32, #tpu.memory_space<vmem>>, vector<1x1xf32>,
      %cst_35 = arith.constant 0.000000e+00 : f32
      %89 = vector.broadcast %cst_35 : f32 to vector<1x1xf32>
      %c0_36 = arith.constant 0 : index
      %c0_37 = arith.constant 0 : index
      %90 = vector.load %arg8[%c0_36, %c0_37] : memref<1x1xf32, #tpu.memory_space<vmem>>, vector<1x1xf32>
      tpu.vector_store %arg8[%c0_36, %c0_37], %89 {strides = array<i32>} : memref<1x1xf32, #tpu.memory_space<vmem>>, vector<1x1xf32>,
    } else {
    }
    %c0 = arith.constant 0 : index
    %c0_1 = arith.constant 0 : index
    %3 = vector.load %arg2[%c0, %c0_1] : memref<8x768xf32, #tpu.memory_space<vmem>>, vector<8x768xf32>
    %4 = arith.truncf %3 : vector<8x768xf32> to vector<8x768xbf16>
    %c0_2 = arith.constant 0 : index
    %c0_3 = arith.constant 0 : index
    %5 = vector.load %arg3[%c0_2, %c0_3] : memref<768x20xbf16, #tpu.memory_space<vmem>>, vector<768x20xbf16>
    %cst = arith.constant dense<0.000000e+00> : vector<8x20xf32>
    %6 = tpu.matmul %4, %5, %cst {dimension_numbers = #tpu.dot_dimension_numbers<[1], [0], [0], [1], [0, 0, 1, 1], [], []>} : vector<8x768xbf16>, vector<768x20xbf16>, vector<8x20xf32> -> vector<8x20xf32>
    %c0_4 = arith.constant 0 : index
    %c0_5 = arith.constant 0 : index
    %7 = vector.load %arg4[%c0_4, %c0_5] : memref<1x20xf32, #tpu.memory_space<vmem>>, vector<1x20xf32>
    %8 = vector.broadcast %7 : vector<1x20xf32> to vector<8x20xf32>
    %9 = arith.addf %6, %8 : vector<8x20xf32>
    %10 = tpu.iota {dimensions = array<i32: 1>} : vector<8x20xi32>
    %c10_i32 = arith.constant 10 : i32
    %11 = vector.broadcast %c10_i32 : i32 to vector<8x20xi32>
    %12 = arith.cmpi slt, %10, %11 : vector<8x20xi32>
    %cst_6 = arith.constant 0xFF800000 : f32
    %13 = vector.broadcast %cst_6 : f32 to vector<8x20xf32>
    %14 = arith.select %12, %9, %13 : vector<8x20xi1>, vector<8x20xf32>
    %cst_7 = arith.constant 0xFF800000 : f32
    %15 = vector.broadcast %cst_7 : f32 to vector<8x20xf32>
    %16 = arith.select %12, %15, %9 : vector<8x20xi1>, vector<8x20xf32>
    %cst_8 = arith.constant dense<0xFF800000> : vector<8xf32>
    %17 = vector.multi_reduction <maximumf>, %14, %cst_8 [1] : vector<8x20xf32> to vector<8xf32>
    %18 = vector.shape_cast %17 : vector<8xf32> to vector<8x1xf32>
    %19 = vector.broadcast %18 : vector<8x1xf32> to vector<8x20xf32>
    %20 = arith.cmpf oeq, %14, %19 : vector<8x20xf32>
    %c20_i32 = arith.constant 20 : i32
    %21 = vector.broadcast %c20_i32 : i32 to vector<8x20xi32>
    %22 = arith.select %20, %10, %21 : vector<8x20xi1>, vector<8x20xi32>
    %cst_9 = arith.constant dense<2147483647> : vector<8xi32>
    %23 = vector.multi_reduction <minsi>, %22, %cst_9 [1] : vector<8x20xi32> to vector<8xi32>
    %24 = vector.shape_cast %23 : vector<8xi32> to vector<8x1xi32>
    %25 = vector.broadcast %18 : vector<8x1xf32> to vector<8x20xf32>
    %26 = arith.subf %14, %25 : vector<8x20xf32>
    %27 = math.exp %26 : vector<8x20xf32>
    %cst_10 = arith.constant dense<0.000000e+00> : vector<8xf32>
    %28 = vector.multi_reduction <add>, %27, %cst_10 [1] : vector<8x20xf32> to vector<8xf32>
    %29 = vector.shape_cast %28 : vector<8xf32> to vector<8x1xf32>
    %30 = math.log %29 : vector<8x1xf32>
    %cst_11 = arith.constant dense<0xFF800000> : vector<8xf32>
    %31 = vector.multi_reduction <maximumf>, %16, %cst_11 [1] : vector<8x20xf32> to vector<8xf32>
    %32 = vector.shape_cast %31 : vector<8xf32> to vector<8x1xf32>
    %33 = vector.broadcast %32 : vector<8x1xf32> to vector<8x20xf32>
    %34 = arith.subf %16, %33 : vector<8x20xf32>
    %35 = math.exp %34 : vector<8x20xf32>
    %cst_12 = arith.constant dense<0.000000e+00> : vector<8xf32>
    %36 = vector.multi_reduction <add>, %35, %cst_12 [1] : vector<8x20xf32> to vector<8xf32>
    %37 = vector.shape_cast %36 : vector<8xf32> to vector<8x1xf32>
    %38 = math.log %37 : vector<8x1xf32>
    %39 = arith.addf %38, %32 : vector<8x1xf32>
    %c10_i32_13 = arith.constant 10 : i32
    %40 = vector.broadcast %c10_i32_13 : i32 to vector<8x1xi32>
    %41 = arith.addi %24, %40 : vector<8x1xi32>
    %42 = vector.broadcast %41 : vector<8x1xi32> to vector<8x20xi32>
    %43 = arith.cmpi eq, %10, %42 : vector<8x20xi32>
    %cst_14 = arith.constant 0.000000e+00 : f32
    %44 = vector.broadcast %cst_14 : f32 to vector<8x20xf32>
    %45 = arith.select %43, %9, %44 : vector<8x20xi1>, vector<8x20xf32>
    %cst_15 = arith.constant dense<0.000000e+00> : vector<8xf32>
    %46 = vector.multi_reduction <add>, %45, %cst_15 [1] : vector<8x20xf32> to vector<8xf32>
    %47 = vector.shape_cast %46 : vector<8xf32> to vector<8x1xf32>
    %48 = arith.subf %39, %47 : vector<8x1xf32>
    %c1_i32 = arith.constant 1 : i32
    %49 = arith.muli %arg0, %c1_i32 : i32
    %50 = arith.addi %49, %arg1 : i32
    %51 = tpu.iota {dimensions = array<i32: 0>} : vector<8x1xi32>
    %c8_i32 = arith.constant 8 : i32
    %52 = arith.muli %50, %c8_i32 : i32
    %53 = vector.broadcast %52 : i32 to vector<8x1xi32>
    %54 = arith.addi %51, %53 : vector<8x1xi32>
    %c2_i32 = arith.constant 2 : i32
    %55 = vector.broadcast %c2_i32 : i32 to vector<8x1xi32>
    %56 = arith.cmpi slt, %54, %55 : vector<8x1xi32>
    %57 = arith.extui %56 : vector<8x1xi1> to vector<8x1xi32>
    %58 = arith.sitofp %57 : vector<8x1xi32> to vector<8x1xf32>
    %59 = arith.mulf %30, %58 : vector<8x1xf32>
    %60 = arith.mulf %48, %58 : vector<8x1xf32>
    %c0_16 = arith.constant 0 : index
    %c0_17 = arith.constant 0 : index
    %61 = vector.load %arg7[%c0_16, %c0_17] : memref<1x1xf32, #tpu.memory_space<vmem>>, vector<1x1xf32>
    %cst_18 = arith.constant dense<0.000000e+00> : vector<1xf32>
    %62 = vector.multi_reduction <add>, %59, %cst_18 [0] : vector<8x1xf32> to vector<1xf32>
    %63 = vector.shape_cast %62 : vector<1xf32> to vector<1x1xf32>
    %64 = arith.addf %61, %63 : vector<1x1xf32>
    %c0_19 = arith.constant 0 : index
    %c0_20 = arith.constant 0 : index
    %65 = vector.load %arg7[%c0_19, %c0_20] : memref<1x1xf32, #tpu.memory_space<vmem>>, vector<1x1xf32>
    tpu.vector_store %arg7[%c0_19, %c0_20], %64 {strides = array<i32>} : memref<1x1xf32, #tpu.memory_space<vmem>>, vector<1x1xf32>,
    %c0_21 = arith.constant 0 : index
    %c0_22 = arith.constant 0 : index
    %66 = vector.load %arg8[%c0_21, %c0_22] : memref<1x1xf32, #tpu.memory_space<vmem>>, vector<1x1xf32>
    %cst_23 = arith.constant dense<0.000000e+00> : vector<1xf32>
    %67 = vector.multi_reduction <add>, %60, %cst_23 [0] : vector<8x1xf32> to vector<1xf32>
    %68 = vector.shape_cast %67 : vector<1xf32> to vector<1x1xf32>
    %69 = arith.addf %66, %68 : vector<1x1xf32>
    %c0_24 = arith.constant 0 : index
    %c0_25 = arith.constant 0 : index
    %70 = vector.load %arg8[%c0_24, %c0_25] : memref<1x1xf32, #tpu.memory_space<vmem>>, vector<1x1xf32>
    tpu.vector_store %arg8[%c0_24, %c0_25], %69 {strides = array<i32>} : memref<1x1xf32, #tpu.memory_space<vmem>>, vector<1x1xf32>,
    %71 = vector.broadcast %24 : vector<8x1xi32> to vector<8x20xi32>
    %72 = arith.cmpi eq, %10, %71 : vector<8x20xi32>
    %73 = arith.extui %72 : vector<8x20xi1> to vector<8x20xi32>
    %74 = arith.sitofp %73 : vector<8x20xi32> to vector<8x20xf32>
    %75 = arith.truncf %74 : vector<8x20xf32> to vector<8x20xbf16>
    %76 = tpu.iota {dimensions = array<i32: 1>} : vector<8x20xi32>
    %77 = arith.sitofp %76 : vector<8x20xi32> to vector<8x20xbf16>
    %cst_26 = arith.constant dense<0.000000e+00> : vector<8x8xf32>
    %78 = tpu.matmul %77, %75, %cst_26 {dimension_numbers = #tpu.dot_dimension_numbers<[1], [1], [0], [0], [0, 0, 1, 0], [], []>} : vector<8x20xbf16>, vector<8x20xbf16>, vector<8x8xf32> -> vector<8x8xf32>
    %79 = vector.extract_strided_slice %78 {offsets = [0, 0], sizes = [1, 8], strides = [1, 1]} : vector<8x8xf32> to vector<1x8xf32>
    %80 = arith.fptosi %79 : vector<1x8xf32> to vector<1x8xi32>
    %c0_27 = arith.constant 0 : index
    %c0_28 = arith.constant 0 : index
    %c0_29 = arith.constant 0 : index
    %81 = vector.load %arg5[%c0_27, %c0_28, %c0_29] : memref<1x1x8xi32, #tpu.memory_space<vmem>>, vector<1x1x8xi32>
    %82 = vector.shape_cast %81 : vector<1x1x8xi32> to vector<1x8xi32>
    %83 = vector.shape_cast %80 : vector<1x8xi32> to vector<1x1x8xi32>
    tpu.vector_store %arg5[%c0_27, %c0_28, %c0_29], %83 {strides = array<i32>} : memref<1x1x8xi32, #tpu.memory_space<vmem>>, vector<1x1x8xi32>,
    %c0_i32_30 = arith.constant 0 : i32
    %84 = arith.cmpi eq, %arg1, %c0_i32_30 : i32
    %85 = arith.extui %84 : i1 to i32
    %c0_i32_31 = arith.constant 0 : i32
    %86 = arith.cmpi ne, %85, %c0_i32_31 : i32
    scf.if %86 {
      %87 = tpu.iota {dimensions = array<i32: 2>} : vector<1x1x128xi32>
      %c0_32 = arith.constant 0 : index
      %c0_33 = arith.constant 0 : index
      %88 = vector.load %arg7[%c0_32, %c0_33] : memref<1x1xf32, #tpu.memory_space<vmem>>, vector<1x1xf32>
      %89 = vector.shape_cast %88 : vector<1x1xf32> to vector<1x1x1xf32>
      %c0_34 = arith.constant 0 : index
      %c0_35 = arith.constant 0 : index
      %90 = vector.load %arg8[%c0_34, %c0_35] : memref<1x1xf32, #tpu.memory_space<vmem>>, vector<1x1xf32>
      %91 = vector.shape_cast %90 : vector<1x1xf32> to vector<1x1x1xf32>
      %c0_i32_36 = arith.constant 0 : i32
      %92 = vector.broadcast %c0_i32_36 : i32 to vector<1x1x128xi32>
      %93 = arith.cmpi eq, %87, %92 : vector<1x1x128xi32>
      %c1_i32_37 = arith.constant 1 : i32
      %94 = vector.broadcast %c1_i32_37 : i32 to vector<1x1x128xi32>
      %95 = arith.cmpi eq, %87, %94 : vector<1x1x128xi32>
      %cst_38 = arith.constant 0.000000e+00 : f32
      %96 = vector.shape_cast %91 : vector<1x1x1xf32> to vector<1x1x1xf32>
      %97 = vector.broadcast %96 : vector<1x1x1xf32> to vector<1x1x128xf32>
      %98 = vector.broadcast %cst_38 : f32 to vector<1x1x128xf32>
      %99 = arith.select %95, %97, %98 : vector<1x1x128xi1>, vector<1x1x128xf32>
      %100 = vector.shape_cast %89 : vector<1x1x1xf32> to vector<1x1x1xf32>
      %101 = vector.broadcast %100 : vector<1x1x1xf32> to vector<1x1x128xf32>
      %102 = arith.select %93, %101, %99 : vector<1x1x128xi1>, vector<1x1x128xf32>
      %c0_39 = arith.constant 0 : index
      %c0_40 = arith.constant 0 : index
      %c0_41 = arith.constant 0 : index
      %103 = vector.load %arg6[%c0_39, %c0_40, %c0_41] : memref<1x1x128xf32, #tpu.memory_space<vmem>>, vector<1x1x128xf32>
      tpu.vector_store %arg6[%c0_39, %c0_40, %c0_41], %102 {strides = array<i32>} : memref<1x1x128xf32, #tpu.memory_space<vmem>>, vector<1x1x128xf32>,
    } else {
    }
    return
  }
  func.func @transform_0(%arg0: i32, %arg1: i32) -> (i32, i32) {
    %c1_i32 = arith.constant 1 : i32
    %0 = arith.muli %arg0, %c1_i32 : i32
    %1 = arith.addi %0, %arg1 : i32
    %c0_i32 = arith.constant 0 : i32
    %c0_i32_0 = arith.constant 0 : i32
    return %1, %c0_i32 : i32, i32
  }
  func.func @transform_1(%arg0: i32, %arg1: i32) -> (i32, i32) {
    %c0_i32 = arith.constant 0 : i32
    %c0_i32_0 = arith.constant 0 : i32
    %c0_i32_1 = arith.constant 0 : i32
    return %c0_i32, %c0_i32_0 : i32, i32
  }
  func.func @transform_2(%arg0: i32, %arg1: i32) -> (i32, i32) {
    %c0_i32 = arith.constant 0 : i32
    %c0_i32_0 = arith.constant 0 : i32
    %c0_i32_1 = arith.constant 0 : i32
    return %c0_i32, %c0_i32_0 : i32, i32
  }
  func.func @transform_3(%arg0: i32, %arg1: i32) -> (i32, i32, i32) {
    %c1_i32 = arith.constant 1 : i32
    %0 = arith.muli %arg0, %c1_i32 : i32
    %1 = arith.addi %0, %arg1 : i32
    %c0_i32 = arith.constant 0 : i32
    %c0_i32_0 = arith.constant 0 : i32
    %c0_i32_1 = arith.constant 0 : i32
    return %1, %c0_i32, %c0_i32_0 : i32, i32, i32
  }
  func.func @transform_4(%arg0: i32, %arg1: i32) -> (i32, i32, i32) {
    %c0_i32 = arith.constant 0 : i32
    %c0_i32_0 = arith.constant 0 : i32
    %c0_i32_1 = arith.constant 0 : i32
    return %arg0, %c0_i32, %c0_i32_0 : i32, i32, i32
  }
}

</mosaic_0001>

<llo_original>
// kernel: tpu_custom_call.1
$region0: #{tpu_custom_call.1}
  #allocation0 [shape = 'u32[]', space=smem, size = 0x4, offset = 0x4, fixed_abs, tag = 'smem constant byte address 0x4 - core index']
  #allocation1 [shape = 'u32[72,128]{1,0:T(1,128)}', space=vmem, size = 0x9000, scoped, tag = 'internal scratch']
  #allocation2 [shape = 'f32[1,1]{1,0:T(1,128)}', space=vmem, size = 0x200, scoped, tag = 'scratch operand']
  #allocation3 [shape = 'f32[1,1]{1,0:T(1,128)}', space=vmem, size = 0x200, scoped, tag = 'scratch operand']
  %s0 = inlined_call_operand.vmem [shape: f32[8,768], index: 0, kind: input, shape index: {}]
  %s1 = inlined_call_operand.vmem [shape: bf16[768,20], index: 1, kind: input, shape index: {}]
  %s2 = inlined_call_operand.vmem [shape: f32[1,20], index: 2, kind: input, shape index: {}]
  %s3 = inlined_call_operand.hbm [shape: s32[1,1,8], index: 3, kind: output, shape index: {0}]
  %s4 = inlined_call_operand.hbm [shape: f32[1,1,128], index: 4, kind: output, shape index: {1}]
  %5 = xla_tuple %s3, %s4
  %s6 = sld [smem:[#allocation0]]
  $region38: #{tpu_custom_call.1} parent=0
    _
  %s8 = ssub.s32 1, %s6
  %s9 = scalar_select 0, %s8, %s6
  $region1: #{tpu_custom_call.1} parent=0
    #allocation4 [shape = 'u8[512]{0}', space=vmem, size = 0x400, scoped, tag = 'output window, operand 0, single buffered']
    #allocation5 [shape = 's32[1]{0}', space=sflag, size = 0x4, scoped, tag = 'scoped memory for tpu_custom_call.1']
    #allocation6 [shape = 'u8[512]{0}', space=vmem, size = 0x400, scoped, tag = 'output window, operand 1, single buffered']
    #allocation7 [shape = 's32[1]{0}', space=sflag, size = 0x4, scoped, tag = 'scoped memory for tpu_custom_call.1']
    %10 = vsyncpa [#allocation5], 0
    %11 = vsyncpa [#allocation7], 0
    // Predicated region
    $region2: #{tpu_custom_call.1} parent=1 // pred_check
      _
    $region3: #{tpu_custom_call.1} parent=1 // pred_check_branch
      %13 = sbr.rel (0) target = $region5
    $region4: #{tpu_custom_call.1} parent=1 // pred_region
      %s14 = sadd.s32 0, 0
      %p15 = scmp.lt.s32.totalorder %s14, 0
      %s16 = scalar_select %p15, %s14, 0
      %s17 = smul.addr %s16, 6
      %s18 = smul.addr %s17, 8
      %s19 = scalar_lea.vmem %s0, %s18
      %s20 = sadd.s32 0, 0
    $region5: #{tpu_custom_call.1} parent=1 // pred_fallthru
      _
    // Predicated region
    $region6: #{tpu_custom_call.1} parent=1 // pred_check
      _
    $region7: #{tpu_custom_call.1} parent=1 // pred_check_branch
      %22 = sbr.rel (0) target = $region9
    $region8: #{tpu_custom_call.1} parent=1 // pred_region
      _
    $region9: #{tpu_custom_call.1} parent=1 // pred_fallthru
      _
    // Predicated region
    $region10: #{tpu_custom_call.1} parent=1 // pred_check
      _
    $region11: #{tpu_custom_call.1} parent=1 // pred_check_branch
      %24 = sbr.rel (0) target = $region13
    $region12: #{tpu_custom_call.1} parent=1 // pred_region
      _
    $region13: #{tpu_custom_call.1} parent=1 // pred_fallthru
      _
    %s25 = sadd.s32 0, 0
    %p26 = scmp.lt.s32.totalorder %s25, 0
    %s27 = scalar_select %p26, %s25, 0
    %s28 = smul.addr %s27, 6
    %s29 = smul.addr %s28, 8
    %s30 = scalar_lea.vmem %s0, %s29
    %s31 = sadd.s32 0, 0
    %p32 = scmp.lt.s32.totalorder %s31, 0
    %s33 = scalar_select %p32, %s31, 0
    %s34 = smul.addr %s33, 6
    %s35 = smul.addr %s34, 8
    %s36 = scalar_lea.vmem %s0, %s35
    %s37 = sadd.s32 0, 0
    %s38 = sadd.s32 0, 0
    %p40 = scmp.eq.s32.totalorder 0, 0
    // Predicated region
    $region14: #{tpu_custom_call.1} parent=1 // pred_check
      %p41 = pneg %p40
    $region15: #{tpu_custom_call.1} parent=1 // pred_check_branch
      %43 = sbr.rel (%p41) target = $region17
    $region16: #{tpu_custom_call.1} parent=1 // pred_region
      %vm44 = vcmask 0
      %45 = vst.msk [vmem:[#allocation2] sm:$0x1] %vm44, 0.0
      %46 = vst.msk [vmem:[#allocation3] sm:$0x1] %vm44, 0.0
    $region17: #{tpu_custom_call.1} parent=1 // pred_fallthru
      _
    %v47 = vld [vmem:[%s36] sm:$0xff]
    %v48 = vld [vmem:[%s36 + $0x8] sm:$0xff]
    %v49 = vld [vmem:[%s36 + $0x10] sm:$0xff]
    %v50 = vld [vmem:[%s36 + $0x18] sm:$0xff]
    %v51 = vld [vmem:[%s36 + $0x20] sm:$0xff]
    %v52 = vld [vmem:[%s36 + $0x28] sm:$0xff]
    %v53 = vpack.c.bf16 %v47, %v47
    %v54 = vpack.c.bf16 %v48, %v48
    %v55 = vpack.c.bf16 %v49, %v49
    %v56 = vpack.c.bf16 %v50, %v50
    %v57 = vpack.c.bf16 %v51, %v51
    %v58 = vpack.c.bf16 %v52, %v52
    %v59 = vld [vmem:[%s1] sm:$0xf]
    %v60 = vld [vmem:[%s1 + $0x4] sm:$0xf]
    %v61 = vld [vmem:[%s1 + $0x8] sm:$0xf]
    %v62 = vld [vmem:[%s1 + $0xc] sm:$0xf]
    %v63 = vld [vmem:[%s1 + $0x10] sm:$0xf]
    %v64 = vld [vmem:[%s1 + $0x14] sm:$0xf]
    %v65 = vld [vmem:[%s1 + $0x18] sm:$0xf]
    %v66 = vld [vmem:[%s1 + $0x1c] sm:$0xf]
    %v67 = vld [vmem:[%s1 + $0x20] sm:$0xf]
    %v68 = vld [vmem:[%s1 + $0x24] sm:$0xf]
    %v69 = vld [vmem:[%s1 + $0x28] sm:$0xf]
    %v70 = vld [vmem:[%s1 + $0x2c] sm:$0xf]
    %v71 = vld [vmem:[%s1 + $0x30] sm:$0xf]
    %v72 = vld [vmem:[%s1 + $0x34] sm:$0xf]
    %v73 = vld [vmem:[%s1 + $0x38] sm:$0xf]
    %v74 = vld [vmem:[%s1 + $0x3c] sm:$0xf]
    %v75 = vld [vmem:[%s1 + $0x40] sm:$0xf]
    %v76 = vld [vmem:[%s1 + $0x44] sm:$0xf]
    %v77 = vld [vmem:[%s1 + $0x48] sm:$0xf]
    %v78 = vld [vmem:[%s1 + $0x4c] sm:$0xf]
    %v79 = vld [vmem:[%s1 + $0x50] sm:$0xf]
    %v80 = vld [vmem:[%s1 + $0x54] sm:$0xf]
    %v81 = vld [vmem:[%s1 + $0x58] sm:$0xf]
    %v82 = vld [vmem:[%s1 + $0x5c] sm:$0xf]
    %v83 = vld [vmem:[%s1 + $0x60] sm:$0xf]
    %v84 = vld [vmem:[%s1 + $0x64] sm:$0xf]
    %v85 = vld [vmem:[%s1 + $0x68] sm:$0xf]
    %v86 = vld [vmem:[%s1 + $0x6c] sm:$0xf]
    %v87 = vld [vmem:[%s1 + $0x70] sm:$0xf]
    %v88 = vld [vmem:[%s1 + $0x74] sm:$0xf]
    %v89 = vld [vmem:[%s1 + $0x78] sm:$0xf]
    %v90 = vld [vmem:[%s1 + $0x7c] sm:$0xf]
    %v91 = vld [vmem:[%s1 + $0x80] sm:$0xf]
    %v92 = vld [vmem:[%s1 + $0x84] sm:$0xf]
    %v93 = vld [vmem:[%s1 + $0x88] sm:$0xf]
    %v94 = vld [vmem:[%s1 + $0x8c] sm:$0xf]
    %v95 = vld [vmem:[%s1 + $0x90] sm:$0xf]
    %v96 = vld [vmem:[%s1 + $0x94] sm:$0xf]
    %v97 = vld [vmem:[%s1 + $0x98] sm:$0xf]
    %v98 = vld [vmem:[%s1 + $0x9c] sm:$0xf]
    %v99 = vld [vmem:[%s1 + $0xa0] sm:$0xf]
    %v100 = vld [vmem:[%s1 + $0xa4] sm:$0xf]
    %v101 = vld [vmem:[%s1 + $0xa8] sm:$0xf]
    %v102 = vld [vmem:[%s1 + $0xac] sm:$0xf]
    %v103 = vld [vmem:[%s1 + $0xb0] sm:$0xf]
    %v104 = vld [vmem:[%s1 + $0xb4] sm:$0xf]
    %v105 = vld [vmem:[%s1 + $0xb8] sm:$0xf]
    %v106 = vld [vmem:[%s1 + $0xbc] sm:$0xf]
    %v107 = vld [vmem:[%s1 + $0xc0] sm:$0xf]
    %v108 = vld [vmem:[%s1 + $0xc4] sm:$0xf]
    %v109 = vld [vmem:[%s1 + $0xc8] sm:$0xf]
    %v110 = vld [vmem:[%s1 + $0xcc] sm:$0xf]
    %v111 = vld [vmem:[%s1 + $0xd0] sm:$0xf]
    %v112 = vld [vmem:[%s1 + $0xd4] sm:$0xf]
    %v113 = vld [vmem:[%s1 + $0xd8] sm:$0xf]
    %v114 = vld [vmem:[%s1 + $0xdc] sm:$0xf]
    %v115 = vld [vmem:[%s1 + $0xe0] sm:$0xf]
    %v116 = vld [vmem:[%s1 + $0xe4] sm:$0xf]
    %v117 = vld [vmem:[%s1 + $0xe8] sm:$0xf]
    %v118 = vld [vmem:[%s1 + $0xec] sm:$0xf]
    %v119 = vld [vmem:[%s1 + $0xf0] sm:$0xf]
    %v120 = vld [vmem:[%s1 + $0xf4] sm:$0xf]
    %v121 = vld [vmem:[%s1 + $0xf8] sm:$0xf]
    %v122 = vld [vmem:[%s1 + $0xfc] sm:$0xf]
    %v123 = vld [vmem:[%s1 + $0x100] sm:$0xf]
    %v124 = vld [vmem:[%s1 + $0x104] sm:$0xf]
    %v125 = vld [vmem:[%s1 + $0x108] sm:$0xf]
    %v126 = vld [vmem:[%s1 + $0x10c] sm:$0xf]
    %v127 = vld [vmem:[%s1 + $0x110] sm:$0xf]
    %v128 = vld [vmem:[%s1 + $0x114] sm:$0xf]
    %v129 = vld [vmem:[%s1 + $0x118] sm:$0xf]
    %v130 = vld [vmem:[%s1 + $0x11c] sm:$0xf]
    %v131 = vld [vmem:[%s1 + $0x120] sm:$0xf]
    %v132 = vld [vmem:[%s1 + $0x124] sm:$0xf]
    %v133 = vld [vmem:[%s1 + $0x128] sm:$0xf]
    %v134 = vld [vmem:[%s1 + $0x12c] sm:$0xf]
    %v135 = vld [vmem:[%s1 + $0x130] sm:$0xf]
    %v136 = vld [vmem:[%s1 + $0x134] sm:$0xf]
    %v137 = vld [vmem:[%s1 + $0x138] sm:$0xf]
    %v138 = vld [vmem:[%s1 + $0x13c] sm:$0xf]
    %v139 = vld [vmem:[%s1 + $0x140] sm:$0xf]
    %v140 = vld [vmem:[%s1 + $0x144] sm:$0xf]
    %v141 = vld [vmem:[%s1 + $0x148] sm:$0xf]
    %v142 = vld [vmem:[%s1 + $0x14c] sm:$0xf]
    %v143 = vld [vmem:[%s1 + $0x150] sm:$0xf]
    %v144 = vld [vmem:[%s1 + $0x154] sm:$0xf]
    %v145 = vld [vmem:[%s1 + $0x158] sm:$0xf]
    %v146 = vld [vmem:[%s1 + $0x15c] sm:$0xf]
    %v147 = vld [vmem:[%s1 + $0x160] sm:$0xf]
    %v148 = vld [vmem:[%s1 + $0x164] sm:$0xf]
    %v149 = vld [vmem:[%s1 + $0x168] sm:$0xf]
    %v150 = vld [vmem:[%s1 + $0x16c] sm:$0xf]
    %v151 = vld [vmem:[%s1 + $0x170] sm:$0xf]
    %v152 = vld [vmem:[%s1 + $0x174] sm:$0xf]
    %v153 = vld [vmem:[%s1 + $0x178] sm:$0xf]
    %v154 = vld [vmem:[%s1 + $0x17c] sm:$0xf]
    %v155 = vld [vmem:[%s2] sm:$0x1]
    %v157 = vperm.slane %v155, 0
    %v255 = vunpack.c.l.b16 %v59
    %v256 = vunpack.c.l.b16 %v60
    %v257 = vunpack.c.l.b16 %v61
    %v258 = vunpack.c.l.b16 %v62
    %v259 = vunpack.c.l.b16 %v63
    %v260 = vunpack.c.l.b16 %v64
    %v261 = vunpack.c.l.b16 %v65
    %v262 = vunpack.c.l.b16 %v66
    %v263 = vunpack.c.l.b16 %v67
    %v264 = vunpack.c.l.b16 %v68
    %v265 = vunpack.c.l.b16 %v69
    %v266 = vunpack.c.l.b16 %v70
    %v267 = vunpack.c.l.b16 %v71
    %v268 = vunpack.c.l.b16 %v72
    %v269 = vunpack.c.l.b16 %v73
    %v270 = vunpack.c.l.b16 %v74
    %v271 = vunpack.c.l.b16 %v75
    %v272 = vunpack.c.l.b16 %v76
    %v273 = vunpack.c.l.b16 %v77
    %v274 = vunpack.c.l.b16 %v78
    %v275 = vunpack.c.l.b16 %v79
    %v276 = vunpack.c.l.b16 %v80
    %v277 = vunpack.c.l.b16 %v81
    %v278 = vunpack.c.l.b16 %v82
    %v279 = vunpack.c.l.b16 %v83
    %v280 = vunpack.c.l.b16 %v84
    %v281 = vunpack.c.l.b16 %v85
    %v282 = vunpack.c.l.b16 %v86
    %v283 = vunpack.c.l.b16 %v87
    %v284 = vunpack.c.l.b16 %v88
    %v285 = vunpack.c.l.b16 %v89
    %v286 = vunpack.c.l.b16 %v90
    %v287 = vunpack.c.l.b16 %v91
    %v288 = vunpack.c.l.b16 %v92
    %v289 = vunpack.c.l.b16 %v93
    %v290 = vunpack.c.l.b16 %v94
    %v291 = vunpack.c.l.b16 %v95
    %v292 = vunpack.c.l.b16 %v96
    %v293 = vunpack.c.l.b16 %v97
    %v294 = vunpack.c.l.b16 %v98
    %v295 = vunpack.c.l.b16 %v99
    %v296 = vunpack.c.l.b16 %v100
    %v297 = vunpack.c.l.b16 %v101
    %v298 = vunpack.c.l.b16 %v102
    %v299 = vunpack.c.l.b16 %v103
    %v300 = vunpack.c.l.b16 %v104
    %v301 = vunpack.c.l.b16 %v105
    %v302 = vunpack.c.l.b16 %v106
    %v303 = vunpack.c.l.b16 %v107
    %v304 = vunpack.c.l.b16 %v108
    %v305 = vunpack.c.l.b16 %v109
    %v306 = vunpack.c.l.b16 %v110
    %v307 = vunpack.c.l.b16 %v111
    %v308 = vunpack.c.l.b16 %v112
    %v309 = vunpack.c.l.b16 %v113
    %v310 = vunpack.c.l.b16 %v114
    %v311 = vunpack.c.l.b16 %v115
    %v312 = vunpack.c.l.b16 %v116
    %v313 = vunpack.c.l.b16 %v117
    %v314 = vunpack.c.l.b16 %v118
    %v315 = vunpack.c.l.b16 %v119
    %v316 = vunpack.c.l.b16 %v120
    %v317 = vunpack.c.l.b16 %v121
    %v318 = vunpack.c.l.b16 %v122
    %v319 = vunpack.c.l.b16 %v123
    %v320 = vunpack.c.l.b16 %v124
    %v321 = vunpack.c.l.b16 %v125
    %v322 = vunpack.c.l.b16 %v126
    %v323 = vunpack.c.l.b16 %v127
    %v324 = vunpack.c.l.b16 %v128
    %v325 = vunpack.c.l.b16 %v129
    %v326 = vunpack.c.l.b16 %v130
    %v327 = vunpack.c.l.b16 %v131
    %v328 = vunpack.c.l.b16 %v132
    %v329 = vunpack.c.l.b16 %v133
    %v330 = vunpack.c.l.b16 %v134
    %v331 = vunpack.c.l.b16 %v135
    %v332 = vunpack.c.l.b16 %v136
    %v333 = vunpack.c.l.b16 %v137
    %v334 = vunpack.c.l.b16 %v138
    %v335 = vunpack.c.l.b16 %v139
    %v336 = vunpack.c.l.b16 %v140
    %v337 = vunpack.c.l.b16 %v141
    %v338 = vunpack.c.l.b16 %v142
    %v339 = vunpack.c.l.b16 %v143
    %v340 = vunpack.c.l.b16 %v144
    %v341 = vunpack.c.l.b16 %v145
    %v342 = vunpack.c.l.b16 %v146
    %v343 = vunpack.c.l.b16 %v147
    %v344 = vunpack.c.l.b16 %v148
    %v345 = vunpack.c.l.b16 %v149
    %v346 = vunpack.c.l.b16 %v150
    %v347 = vunpack.c.l.b16 %v151
    %v348 = vunpack.c.l.b16 %v152
    %v349 = vunpack.c.l.b16 %v153
    %v350 = vunpack.c.l.b16 %v154
    %v351 = vpack.c.b16 %v256, %v255
    %v352 = vpack.c.b16 %v258, %v257
    %v353 = vpack.c.b16 %v260, %v259
    %v354 = vpack.c.b16 %v262, %v261
    %v355 = vpack.c.b16 %v264, %v263
    %v356 = vpack.c.b16 %v266, %v265
    %v357 = vpack.c.b16 %v268, %v267
    %v358 = vpack.c.b16 %v270, %v269
    %v359 = vpack.c.b16 %v272, %v271
    %v360 = vpack.c.b16 %v274, %v273
    %v361 = vpack.c.b16 %v276, %v275
    %v362 = vpack.c.b16 %v278, %v277
    %v363 = vpack.c.b16 %v280, %v279
    %v364 = vpack.c.b16 %v282, %v281
    %v365 = vpack.c.b16 %v284, %v283
    %v366 = vpack.c.b16 %v286, %v285
    %v367 = vpack.c.b16 %v288, %v287
    %v368 = vpack.c.b16 %v290, %v289
    %v369 = vpack.c.b16 %v292, %v291
    %v370 = vpack.c.b16 %v294, %v293
    %v371 = vpack.c.b16 %v296, %v295
    %v372 = vpack.c.b16 %v298, %v297
    %v373 = vpack.c.b16 %v300, %v299
    %v374 = vpack.c.b16 %v302, %v301
    %v375 = vpack.c.b16 %v304, %v303
    %v376 = vpack.c.b16 %v306, %v305
    %v377 = vpack.c.b16 %v308, %v307
    %v378 = vpack.c.b16 %v310, %v309
    %v379 = vpack.c.b16 %v312, %v311
    %v380 = vpack.c.b16 %v314, %v313
    %v381 = vpack.c.b16 %v316, %v315
    %v382 = vpack.c.b16 %v318, %v317
    %v383 = vpack.c.b16 %v320, %v319
    %v384 = vpack.c.b16 %v322, %v321
    %v385 = vpack.c.b16 %v324, %v323
    %v386 = vpack.c.b16 %v326, %v325
    %v387 = vpack.c.b16 %v328, %v327
    %v388 = vpack.c.b16 %v330, %v329
    %v389 = vpack.c.b16 %v332, %v331
    %v390 = vpack.c.b16 %v334, %v333
    %v391 = vpack.c.b16 %v336, %v335
    %v392 = vpack.c.b16 %v338, %v337
    %v393 = vpack.c.b16 %v340, %v339
    %v394 = vpack.c.b16 %v342, %v341
    %v395 = vpack.c.b16 %v344, %v343
    %v396 = vpack.c.b16 %v346, %v345
    %v397 = vpack.c.b16 %v348, %v347
    %v398 = vpack.c.b16 %v350, %v349
    %447 = vmatpush.bf16.msra.mxu0 %v358
    %448 = vmatpush.bf16.msra.mxu0 %v357
    %449 = vmatpush.bf16.msra.mxu0 %v356
    %450 = vmatpush.bf16.msra.mxu0 %v355
    %451 = vmatpush.bf16.msra.mxu0 %v354
    %452 = vmatpush.bf16.msra.mxu0 %v353
    %453 = vmatpush.bf16.msra.mxu0 %v352
    %454 = vmatpush.bf16.msra.mxu0 %v351
    %455 = vmatmul.bf16.gmra.mxu0 %v53
    %v456 = vpop.f32.mrf.mxu0
    %v457 = vadd.f32 %v157, %v456
    %v458 = vpop.f32.mrf.mxu0
    %459 = vdwg.mxu0
    %460 = vmatpush.bf16.msra.mxu0 %v366
    %461 = vmatpush.bf16.msra.mxu0 %v365
    %462 = vmatpush.bf16.msra.mxu0 %v364
    %463 = vmatpush.bf16.msra.mxu0 %v363
    %464 = vmatpush.bf16.msra.mxu0 %v362
    %465 = vmatpush.bf16.msra.mxu0 %v361
    %466 = vmatpush.bf16.msra.mxu0 %v360
    %467 = vmatpush.bf16.msra.mxu0 %v359
    %468 = vmatmul.bf16.gmra.mxu0 %v54
    %v469 = vpop.f32.mrf.mxu0
    %v470 = vadd.f32 %v457, %v469
    %v471 = vpop.f32.mrf.mxu0
    %472 = vdwg.mxu0
    %473 = vmatpush.bf16.msra.mxu0 %v374
    %474 = vmatpush.bf16.msra.mxu0 %v373
    %475 = vmatpush.bf16.msra.mxu0 %v372
    %476 = vmatpush.bf16.msra.mxu0 %v371
    %477 = vmatpush.bf16.msra.mxu0 %v370
    %478 = vmatpush.bf16.msra.mxu0 %v369
    %479 = vmatpush.bf16.msra.mxu0 %v368
    %480 = vmatpush.bf16.msra.mxu0 %v367
    %481 = vmatmul.bf16.gmra.mxu0 %v55
    %v482 = vpop.f32.mrf.mxu0
    %v483 = vadd.f32 %v470, %v482
    %v484 = vpop.f32.mrf.mxu0
    %485 = vdwg.mxu0
    %486 = vmatpush.bf16.msra.mxu0 %v382
    %487 = vmatpush.bf16.msra.mxu0 %v381
    %488 = vmatpush.bf16.msra.mxu0 %v380
    %489 = vmatpush.bf16.msra.mxu0 %v379
    %490 = vmatpush.bf16.msra.mxu0 %v378
    %491 = vmatpush.bf16.msra.mxu0 %v377
    %492 = vmatpush.bf16.msra.mxu0 %v376
    %493 = vmatpush.bf16.msra.mxu0 %v375
    %494 = vmatmul.bf16.gmra.mxu0 %v56
    %v495 = vpop.f32.mrf.mxu0
    %v496 = vadd.f32 %v483, %v495
    %v497 = vpop.f32.mrf.mxu0
    %498 = vdwg.mxu0
    %499 = vmatpush.bf16.msra.mxu0 %v390
    %500 = vmatpush.bf16.msra.mxu0 %v389
    %501 = vmatpush.bf16.msra.mxu0 %v388
    %502 = vmatpush.bf16.msra.mxu0 %v387
    %503 = vmatpush.bf16.msra.mxu0 %v386
    %504 = vmatpush.bf16.msra.mxu0 %v385
    %505 = vmatpush.bf16.msra.mxu0 %v384
    %506 = vmatpush.bf16.msra.mxu0 %v383
    %507 = vmatmul.bf16.gmra.mxu0 %v57
    %v508 = vpop.f32.mrf.mxu0
    %v509 = vadd.f32 %v496, %v508
    %v510 = vpop.f32.mrf.mxu0
    %511 = vdwg.mxu0
    %512 = vmatpush.bf16.msra.mxu0 %v398
    %513 = vmatpush.bf16.msra.mxu0 %v397
    %514 = vmatpush.bf16.msra.mxu0 %v396
    %515 = vmatpush.bf16.msra.mxu0 %v395
    %516 = vmatpush.bf16.msra.mxu0 %v394
    %517 = vmatpush.bf16.msra.mxu0 %v393
    %518 = vmatpush.bf16.msra.mxu0 %v392
    %519 = vmatpush.bf16.msra.mxu0 %v391
    %520 = vmatmul.bf16.gmra.mxu0 %v58
    %v521 = vpop.f32.mrf.mxu0
    %v522 = vadd.f32 %v509, %v521
    %v523 = vpop.f32.mrf.mxu0
    %524 = vdwg.mxu0
    %v525 = vlaneseq
    %v526 = vand.u32 %v525, 127
    %vm527 = vcmp.lt.s32.totalorder %v526, 10
    %v528 = vsel %vm527, %v522, -inf
    %v529 = vsel %vm527, -inf, %v522
    %vm530 = vcmask 162816
    %v531 = vsel %vm530, %v528, -inf
    %532 = vmax.xlane.f32.xlu0 %v531
    %v533 = vpop.xlane.xlu0 %532
    %vm534 = vcmp.eq.f32.partialorder %v528, %v533
    %v535 = vsel %vm534, %v526, 20
    %v536 = vsel %vm530, %v535, 2147483647
    %v537 = vand.u32 %v536, 65535
    %v538 = vshra.s32 %v536, 16
    %v539 = vcvt.s32.f32 %v537
    %v540 = vcvt.s32.f32 %v538
    %541 = vmin.xlane.f32.xlu0 %v540
    %v542 = vpop.xlane.xlu0 %541
    %vm543 = vcmp.eq.f32.partialorder %v540, %v542
    %v544 = vsel %vm543, %v539, inf
    %545 = vmin.xlane.f32.xlu0 %v544
    %v546 = vpop.xlane.xlu0 %545
    %v547 = vcvt.f32.s32 %v546
    %v548 = vcvt.f32.s32 %v542
    %v549 = vshll.u32 %v548, 16
    %v550 = vadd.s32 %v549, %v547
    %v551 = vsub.f32 %v528, %v533
    %v552 = vmul.f32 %v551, 1.442695
    %v553 = vpow.pop %v552
    %v554 = vsel %vm530, %v553, 0.0
    %555 = vadd.xlane.f32.xlu0 %v554
    %v556 = vpop.xlane.xlu0 %555
    %v557 = vlog2.pop %v556
    %v558 = vmul.f32 %v557, 0.6931472
    %v559 = vsel %vm530, %v529, -inf
    %560 = vmax.xlane.f32.xlu0 %v559
    %v561 = vpop.xlane.xlu0 %560
    %v562 = vsub.f32 %v529, %v561
    %v563 = vmul.f32 %v562, 1.442695
    %v564 = vpow.pop %v563
    %v565 = vsel %vm530, %v564, 0.0
    %566 = vadd.xlane.f32.xlu0 %v565
    %v567 = vpop.xlane.xlu0 %566
    %v568 = vlog2.pop %v567
    %v569 = vmul.f32 %v568, 0.6931472
    %v570 = vadd.f32 %v569, %v561
    %v571 = vadd.s32 %v550, 10
    %vm572 = vcmp.eq.s32.totalorder %v526, %v571
    %v573 = vsel %vm572, %v522, 0.0
    %v574 = vsel %vm530, %v573, 0.0
    %575 = vadd.xlane.f32.xlu0 %v574
    %v576 = vpop.xlane.xlu0 %575
    %v577 = vsub.f32 %v570, %v576
    %s578 = sadd.s32 0, 0
    %v579 = vlaneseq
    %v580 = vshrl.u32 %v579, 7
    %s581 = smul.u32 %s578, 8
    %v582 = vstv %s581
    %v583 = vadd.s32 %v580, %v582
    %vm584 = vcmp.lt.s32.totalorder %v583, 2
    %v585 = vsel %vm584, 1, 0
    %v586 = vcvt.s32.f32 %v585
    %v587 = vmul.f32 %v558, %v586
    %v588 = vmul.f32 %v577, %v586
    %v589 = vld [vmem:[#allocation2] sm:$0x1]
    %v590 = vrot.slane %v587, 4
    %v591 = vadd.f32 %v587, %v590
    %v592 = vrot.slane %v591, 2
    %v593 = vadd.f32 %v591, %v592
    %v594 = vrot.slane %v593, 1
    %v595 = vadd.f32 %v593, %v594
    %v596 = vadd.f32 %v589, %v595
    %vm597 = vcmask 0
    %598 = vst.msk [vmem:[#allocation2] sm:$0x1] %vm597, %v596
    %v599 = vld [vmem:[#allocation3] sm:$0x1]
    %v600 = vrot.slane %v588, 4
    %v601 = vadd.f32 %v588, %v600
    %v602 = vrot.slane %v601, 2
    %v603 = vadd.f32 %v601, %v602
    %v604 = vrot.slane %v603, 1
    %v605 = vadd.f32 %v603, %v604
    %v606 = vadd.f32 %v599, %v605
    %607 = vst.msk [vmem:[#allocation3] sm:$0x1] %vm597, %v606
    %vm608 = vcmp.eq.s32.totalorder %v526, %v550
    %v609 = vsel %vm608, 1, 0
    %v610 = vcvt.s32.f32 %v609
    %v611 = vpack.c.bf16 %v610, %v610
    %v612 = vcvt.s32.f32 %v526
    %v613 = vpack.c.bf16 %v612, %v612
    %v615 = vsel %vm530, %v613, 0
    %v618 = vsel %vm530, %v611, 0
    %620 = vmatpush.bf16.xpose.msra.mxu0 0
    %621 = vmatpush.bf16.xpose.msra.mxu0 0
    %622 = vmatpush.bf16.xpose.msra.mxu0 0
    %623 = vmatpush.bf16.xpose.msra.mxu0 0
    %624 = vmatpush.bf16.xpose.msra.mxu0 0
    %625 = vmatpush.bf16.xpose.msra.mxu0 0
    %626 = vmatpush.bf16.xpose.msra.mxu0 0
    %627 = vmatpush.bf16.xpose.msra.mxu0 %v618
    %628 = vmatmul.bf16.gmra.mxu0 %v615
    %v629 = vpop.f32.mrf.mxu0
    %v630 = vadd.f32 0.0, %v629
    %v631 = vpop.f32.mrf.mxu0
    %632 = vdwg.mxu0
    %v633 = vcvt.f32.s32.to.zero.pseudo %v630
    %vm634 = vcmask 57344
    %635 = vst.msk [vmem:[#allocation4] sm:$0x1] %vm634, %v633
    // Predicated region
    $region18: #{tpu_custom_call.1} parent=1 // pred_check
      %p636 = pneg %p40
    $region19: #{tpu_custom_call.1} parent=1 // pred_check_branch
      %638 = sbr.rel (%p636) target = $region21
    $region20: #{tpu_custom_call.1} parent=1 // pred_region
      %v639 = vld [vmem:[#allocation2] sm:$0x1]
      %v640 = vld [vmem:[#allocation3] sm:$0x1]
      %vm641 = vcmp.eq.s32.totalorder %v526, 0
      %vm642 = vcmp.eq.s32.totalorder %v526, 1
      %644 = vset.pattern.permute.xlu0 0
      %645 = vperm.xlu0 %644, %v640
      %v646 = vpop.permute.xlu0 %645
      %v648 = vperm.slane %v646, 0
      %v649 = vsel %vm642, %v648, 0.0
      %651 = vset.pattern.permute.xlu0 0
      %652 = vperm.xlu0 %651, %v639
      %v653 = vpop.permute.xlu0 %652
      %v655 = vperm.slane %v653, 0
      %v656 = vsel %vm641, %v655, %v649
      %657 = vst [vmem:[#allocation6] sm:$0x1] %v656
    $region21: #{tpu_custom_call.1} parent=1 // pred_fallthru
      _
    // Predicated region
    $region22: #{tpu_custom_call.1} parent=1 // pred_check
      _
    $region23: #{tpu_custom_call.1} parent=1 // pred_check_branch
      %659 = sbr.rel (0) target = $region25
    $region24: #{tpu_custom_call.1} parent=1 // pred_region
      %s660 = sadd.s32 0, 0
      %662 = vsyncadd [#allocation5], 0
      %s663 = scalar_lea.hbm %s3, %s660
      %s665 = sshll.u32 [#allocation4], 4
      %s666 = int_to_ptr.vmem [resolvable:$true] %s665
      %s667 = sshll.u32 %s663, 4
      %s668 = int_to_ptr.hbm [resolvable:$true] %s667
      %670 = dma.vmem_to_hbm [thread:$0]  %s666, 16, %s668, [#allocation5]
    $region25: #{tpu_custom_call.1} parent=1 // pred_fallthru
      _
    // Predicated region
    $region26: #{tpu_custom_call.1} parent=1 // pred_check
      _
    $region27: #{tpu_custom_call.1} parent=1 // pred_check_branch
      %672 = sbr.rel (0) target = $region29
    $region28: #{tpu_custom_call.1} parent=1 // pred_region
      %674 = vsyncadd [#allocation7], 0
      %s676 = sshll.u32 [#allocation6], 4
      %s677 = int_to_ptr.vmem [resolvable:$true] %s676
      %s678 = sshll.u32 %s4, 4
      %s679 = int_to_ptr.hbm [resolvable:$true] %s678
      %681 = dma.vmem_to_hbm [thread:$0]  %s677, 16, %s679, [#allocation7]
    $region29: #{tpu_custom_call.1} parent=1 // pred_fallthru
      _
    // Predicated region
    $region30: #{tpu_custom_call.1} parent=1 // pred_check
      _
    $region31: #{tpu_custom_call.1} parent=1 // pred_check_branch
      %683 = sbr.rel (0) target = $region33
    $region32: #{tpu_custom_call.1} parent=1 // pred_region
      %685 = dma.done [#allocation5], 16
    $region33: #{tpu_custom_call.1} parent=1 // pred_fallthru
      _
    // Predicated region
    $region34: #{tpu_custom_call.1} parent=1 // pred_check
      _
    $region35: #{tpu_custom_call.1} parent=1 // pred_check_branch
      %687 = sbr.rel (0) target = $region37
    $region36: #{tpu_custom_call.1} parent=1 // pred_region
      %689 = dma.done [#allocation7], 16
    $region37: #{tpu_custom_call.1} parent=1 // pred_fallthru
      _
    %690 = vsyncpa [#allocation5], 1
    %691 = vsyncpa [#allocation7], 1

</llo_original>
